<compile_context>
chip_gen: v7x
topology: tpu7x:2x2x1
jax: 0.10.0
libtpu: 0.0.40
codegen_flags: <defaults>
</compile_context>

<pallas_src>
import jax
import jax.numpy as jnp
from jax import lax
from jax.experimental import pallas as pl
from jax.experimental.pallas import tpu as pltpu


def _mlp_proj_kernel(x_ref, w_ref, b_ref, o_ref):
    # x_ref: (1, C, t_hw)  NCHW activation slab (C major, tokens along lanes)
    # w_ref: (C, E)        pre-transposed weight, resident in VMEM
    # b_ref: (1, E)        bias, resident in VMEM
    # o_ref: (1, t_hw, E)  output token block
    x = x_ref[0]                                  # (C, t_hw)
    acc = lax.dot_general(                        # contract C: (C,t)x(C,E) -> (t,E)
        x, w_ref[...],
        dimension_numbers=(((0,), (0,)), ((), ())),
        preferred_element_type=jnp.float32,       # f32 accumulate on the MXU
    )
    o_ref[0] = (acc + b_ref[...]).astype(o_ref.dtype)   # f32 bias add on the VPU


def _pick_hw_tile(hw, c, e, itemsize, vmem_budget_bytes=24 * 1024 * 1024):
    """Largest HW tile (full HW, or a multiple of 128) fitting a VMEM budget."""
    def step_bytes(t):
        # x tile + out tile are double-buffered by the pipeline; weight/bias
        # are grid-invariant, but budget them twice to stay conservative.
        return 2 * t * (c + e) * itemsize + 2 * (c * e + e) * itemsize

    if step_bytes(hw) <= vmem_budget_bytes:
        return hw                                  # single block along HW
    t = min((hw // 128) * 128, 4096)               # must be a multiple of 128
    while t > 128 and step_bytes(t) > vmem_budget_bytes:
        t -= 128
    return max(t, 128)


def mlp_forward(x_nchw, weight, bias):
    """x_nchw: (B, C, H, W); weight: (E, C) [torch layout]; bias: (E,) -> (B, H*W, E)."""
    B, C, H, W = x_nchw.shape
    E = weight.shape[0]
    HW = H * W

    x3 = x_nchw.reshape(B, C, HW)        # free reshape; transpose folded into kernel
    w_t = jnp.transpose(weight)          # (C, E); tiny one-time weight relayout
    b2 = bias.reshape(1, E)

    itemsize = jnp.dtype(x_nchw.dtype).itemsize
    t_hw = _pick_hw_tile(HW, C, E, max(itemsize, 4))
    n_hw = pl.cdiv(HW, t_hw)

    cost = pl.CostEstimate(
        flops=2 * B * HW * C * E,
        transcendentals=0,
        bytes_accessed=itemsize * (B * HW * C + C * E + E + B * HW * E),
    )

    out = pl.pallas_call(
        _mlp_proj_kernel,
        out_shape=jax.ShapeDtypeStruct((B, HW, E), x_nchw.dtype),
        grid=(B, n_hw),
        in_specs=[
            pl.BlockSpec((1, C, t_hw), lambda b, j: (b, 0, j)),   # NCHW slab
            pl.BlockSpec((C, E), lambda b, j: (0, 0)),            # weight (resident)
            pl.BlockSpec((1, E), lambda b, j: (0, 0)),            # bias (resident)
        ],
        out_specs=pl.BlockSpec((1, t_hw, E), lambda b, j: (b, j, 0)),
        compiler_params=pltpu.CompilerParams(
            dimension_semantics=("parallel", "parallel"),
        ),
        cost_estimate=cost,
    )(x3, w_t, b2)

    return out                                   # (B, H*W, E)


if __name__ == "__main__":
    # Small shapes consistent with the module: input_dim=C=32, embed_dim=E=128
    # (E chosen as a multiple of 128 so output stores are lane-dense).
    B, C, H, W = 2, 32, 16, 16
    E = 128

    key = jax.random.PRNGKey(0)
    kx, kw, kb = jax.random.split(key, 3)

    x = jax.random.normal(kx, (B, C, H, W), dtype=jnp.float32)
    # Deterministic parameter init (mimic nn.Linear uniform(-1/sqrt(C), 1/sqrt(C)))
    bound = 1.0 / jnp.sqrt(jnp.float32(C))
    weight = jax.random.uniform(kw, (E, C), minval=-bound, maxval=bound, dtype=jnp.float32)
    bias = jax.random.uniform(kb, (E,), minval=-bound, maxval=bound, dtype=jnp.float32)

    out = jax.block_until_ready(mlp_forward(x, weight, bias))

    # Pure-JAX reference (same semantics as the PyTorch forward).
    x_tokens = jnp.transpose(x.reshape(B, C, H * W), (0, 2, 1))   # (B, HW, C)
    ref = jnp.einsum("bnc,ec->bne", x_tokens, weight) + bias
    assert out.shape == (B, H * W, E)
    assert jnp.allclose(out, ref, atol=1e-4, rtol=1e-4)

    print("KERNEL_OK")
</pallas_src>

<mosaic_0001>
module attributes {stable_mosaic.version = 11 : i64} {
  func.func @_mlp_proj_kernel(%arg0: i32, %arg1: i32, %arg2: memref<1x32x256xf32, #tpu.memory_space<vmem>>, %arg3: memref<32x128xf32, #tpu.memory_space<vmem>>, %arg4: memref<1x128xf32, #tpu.memory_space<vmem>>, %arg5: memref<1x256x128xf32, #tpu.memory_space<vmem>>) attributes {dimension_semantics = [#tpu.dimension_semantics<parallel>, #tpu.dimension_semantics<parallel>], iteration_bounds = array<i64: 2, 1>, scalar_prefetch = 0 : i64, scratch_operands = 0 : i64, tpu.core_type = #tpu.core_type<tc>, window_params = [{transform_indices = @transform_0, window_bounds = array<i64: 1, 32, 256>}, {pipeline_mode = #tpu.pipeline_mode<synchronous>, transform_indices = @transform_1, window_bounds = array<i64: 32, 128>}, {pipeline_mode = #tpu.pipeline_mode<synchronous>, transform_indices = @transform_2, window_bounds = array<i64: 1, 128>}, {transform_indices = @transform_3, window_bounds = array<i64: 1, 256, 128>}]} {
    %c0 = arith.constant 0 : index
    %c0_0 = arith.constant 0 : index
    %c0_1 = arith.constant 0 : index
    %0 = vector.load %arg2[%c0, %c0_0, %c0_1] : memref<1x32x256xf32, #tpu.memory_space<vmem>>, vector<1x32x256xf32>
    %1 = vector.shape_cast %0 : vector<1x32x256xf32> to vector<32x256xf32>
    %c0_2 = arith.constant 0 : index
    %c0_3 = arith.constant 0 : index
    %2 = vector.load %arg3[%c0_2, %c0_3] : memref<32x128xf32, #tpu.memory_space<vmem>>, vector<32x128xf32>
    %cst = arith.constant dense<0.000000e+00> : vector<256x128xf32>
    %3 = tpu.matmul %1, %2, %cst {dimension_numbers = #tpu.dot_dimension_numbers<[0], [0], [1], [1], [0, 1, 1, 1], [], []>} : vector<32x256xf32>, vector<32x128xf32>, vector<256x128xf32> -> vector<256x128xf32>
    %c0_4 = arith.constant 0 : index
    %c0_5 = arith.constant 0 : index
    %4 = vector.load %arg4[%c0_4, %c0_5] : memref<1x128xf32, #tpu.memory_space<vmem>>, vector<1x128xf32>
    %5 = vector.broadcast %4 : vector<1x128xf32> to vector<256x128xf32>
    %6 = arith.addf %3, %5 : vector<256x128xf32>
    %c0_6 = arith.constant 0 : index
    %c0_7 = arith.constant 0 : index
    %c0_8 = arith.constant 0 : index
    %7 = vector.load %arg5[%c0_6, %c0_7, %c0_8] : memref<1x256x128xf32, #tpu.memory_space<vmem>>, vector<1x256x128xf32>
    %8 = vector.shape_cast %7 : vector<1x256x128xf32> to vector<256x128xf32>
    %9 = vector.shape_cast %6 : vector<256x128xf32> to vector<1x256x128xf32>
    tpu.vector_store %arg5[%c0_6, %c0_7, %c0_8], %9 {strides = array<i32>} : memref<1x256x128xf32, #tpu.memory_space<vmem>>, vector<1x256x128xf32>,
    return
  }
  func.func @transform_0(%arg0: i32, %arg1: i32) -> (i32, i32, i32) {
    %c0_i32 = arith.constant 0 : i32
    %c0_i32_0 = arith.constant 0 : i32
    return %arg0, %c0_i32, %arg1 : i32, i32, i32
  }
  func.func @transform_1(%arg0: i32, %arg1: i32) -> (i32, i32) {
    %c0_i32 = arith.constant 0 : i32
    %c0_i32_0 = arith.constant 0 : i32
    %c0_i32_1 = arith.constant 0 : i32
    return %c0_i32, %c0_i32_0 : i32, i32
  }
  func.func @transform_2(%arg0: i32, %arg1: i32) -> (i32, i32) {
    %c0_i32 = arith.constant 0 : i32
    %c0_i32_0 = arith.constant 0 : i32
    %c0_i32_1 = arith.constant 0 : i32
    return %c0_i32, %c0_i32_0 : i32, i32
  }
  func.func @transform_3(%arg0: i32, %arg1: i32) -> (i32, i32, i32) {
    %c0_i32 = arith.constant 0 : i32
    %c0_i32_0 = arith.constant 0 : i32
    return %arg0, %arg1, %c0_i32 : i32, i32, i32
  }
}

</mosaic_0001>

<llo_original>
// kernel: tpu_custom_call.1
$region0: #{tpu_custom_call.1}
  #allocation0 [shape = 'u32[]', space=smem, size = 0x4, offset = 0x4, fixed_abs, tag = 'smem constant byte address 0x4 - core index']
  #allocation1 [shape = 'u32[144,128]{1,0:T(1,128)}', space=vmem, size = 0x12000, scoped, tag = 'internal scratch']
  %s0 = inlined_call_operand.hbm [shape: f32[2,32,256], index: 0, kind: input, shape index: {}]
  %s1 = inlined_call_operand.hbm [shape: f32[32,128], index: 1, kind: input, shape index: {}]
  %s2 = inlined_call_operand.vmem [shape: f32[1,128], index: 2, kind: input, shape index: {}]
  %s3 = inlined_call_operand.hbm [shape: f32[2,256,128], index: 3, kind: output, shape index: {}]
  %s4 = sld [smem:[#allocation0]]
  $region53: #{tpu_custom_call.1} parent=0
    _
  %s6 = ssub.s32 1, %s4
  %s7 = scalar_select 0, %s6, %s4
  $region1: #{tpu_custom_call.1} parent=0
    #allocation2 [shape = 'u8[65536]{0}', space=vmem, size = 0x10000, scoped, tag = 'input window, operand 0']
    #allocation3 [shape = 's32[2]{0}', space=sflag, size = 0x8, scoped, tag = 'scoped memory for tpu_custom_call.1']
    #allocation4 [shape = 's32[2]{0}', space=sflag, size = 0x8, scoped, tag = 'scoped memory for tpu_custom_call.1']
    #allocation5 [shape = 'u8[16384]{0}', space=vmem, size = 0x4000, scoped, tag = 'input window, operand 1, single buffered']
    #allocation6 [shape = 's32[1]{0}', space=sflag, size = 0x4, scoped, tag = 'scoped memory for tpu_custom_call.1']
    #allocation7 [shape = 'u8[262144]{0}', space=vmem, size = 0x40000, scoped, tag = 'output window, operand 0']
    %8 = vsyncpa [#allocation3], 0
    %s9 = scalar_lea.sflag [#allocation3], 1
    %10 = vsyncpa %s9, 0
    %11 = vsyncpa [#allocation6], 0
    %12 = vsyncpa [#allocation4], 0
    %s13 = scalar_lea.sflag [#allocation4], 1
    %14 = vsyncpa %s13, 0
    loop: start=0, step=1, limit=4
    $region2: #{tpu_custom_call.1} parent=1 // loop_pre_header
      _
    $region3: #{tpu_custom_call.1} parent=1 // loop_header
      %s16 = sphi 0, %s20
      %p17 = scmp.ge.s32.totalorder %s16, 4
      %s23 = sphi 0, %s35
      %s24 = sphi 0, %s31
      %s25 = sphi 0, %s23
      %s26 = sphi 0, %s24
      %s27 = sphi 0, %s25
      %s28 = sphi 0, %s26
      %s40 = sphi 0, %s42
      %s43 = sphi 0, %s40
      %s44 = sphi 0, %s43
      %s60 = sphi 0, %s44
      %s64 = sphi 0, %s64
      %s66 = sphi 0, %s64
      %s67 = sphi 0, %s66
      %s81 = sphi 0, %s67
      %s85 = sphi 0, %s85
      %s87 = sphi 0, %s85
      %s88 = sphi 0, %s87
      %s102 = sphi 0, %s88
      %s110 = sphi 0, %s112
      %s113 = sphi 0, %s110
      %s114 = sphi 0, %s113
      %s130 = sphi 0, %s114
    $region4: #{tpu_custom_call.1} parent=1 // loop_header_branch
      %19 = sbr.rel (%p17) target = $region8
    $region5: #{tpu_custom_call.1} parent=1 // loop_body
      %s21 = ssub.s32 %s16, 1
      %s22 = ssub.s32 %s16, 2
      %s29 = sadd.s32 1, %s24
      %p30 = scmp.ge.s32.totalorder %s29, 1
      %s31 = scalar_select %p30, 0, %s29
      %s32 = sadd.s32 1, %s23
      %s33 = scalar_select %p30, %s32, %s23
      %p34 = scmp.ge.s32.totalorder %s33, 2
      %s35 = scalar_select %p34, 0, %s33
      %s36 = ssub.s32 %s23, %s35
      %s37 = ssub.s32 %s24, %s31
      %s38 = sor.u32 %s36, %s37
      %p39 = scmp.eq.s32.totalorder %s38, 0
      %s41 = sadd.s32 %s40, 1
      %s42 = scalar_select %p39, %s40, %s41
      %p45 = pneg %p39
      %p46 = scmp.eq.s32.totalorder %s16, 1
      %p47 = por %p45, %p46
      %p48 = scmp.ne.s32.totalorder %s40, %s43
      %p49 = scmp.eq.s32.totalorder %s16, 0
      %p50 = por %p48, %p49
      %p51 = scmp.ne.s32.totalorder %s40, %s43
      %p52 = scmp.eq.s32.totalorder %s21, 1
      %p53 = por %p51, %p52
      %p54 = scmp.ne.s32.totalorder %s43, %s44
      %p55 = scmp.eq.s32.totalorder %s21, 0
      %p56 = por %p54, %p55
      %p57 = scmp.ne.s32.totalorder %s43, %s44
      %p58 = scmp.eq.s32.totalorder %s22, 1
      %p59 = por %p57, %p58
      %p61 = scmp.ne.s32.totalorder %s44, %s60
      %p62 = scmp.eq.s32.totalorder %s22, 0
      %p63 = por %p61, %p62
      %s65 = sadd.s32 %s64, 1
      %p68 = scmp.eq.s32.totalorder %s16, 1
      %p69 = scmp.ne.s32.totalorder %s64, %s66
      %p70 = scmp.eq.s32.totalorder %s16, 0
      %p71 = por %p69, %p70
      %p72 = scmp.ne.s32.totalorder %s64, %s66
      %p73 = scmp.eq.s32.totalorder %s21, 1
      %p74 = por %p72, %p73
      %p75 = scmp.ne.s32.totalorder %s66, %s67
      %p76 = scmp.eq.s32.totalorder %s21, 0
      %p77 = por %p75, %p76
      %p78 = scmp.ne.s32.totalorder %s66, %s67
      %p79 = scmp.eq.s32.totalorder %s22, 1
      %p80 = por %p78, %p79
      %p82 = scmp.ne.s32.totalorder %s67, %s81
      %p83 = scmp.eq.s32.totalorder %s22, 0
      %p84 = por %p82, %p83
      %s86 = sadd.s32 %s85, 1
      %p89 = scmp.eq.s32.totalorder %s16, 1
      %p90 = scmp.ne.s32.totalorder %s85, %s87
      %p91 = scmp.eq.s32.totalorder %s16, 0
      %p92 = por %p90, %p91
      %p93 = scmp.ne.s32.totalorder %s85, %s87
      %p94 = scmp.eq.s32.totalorder %s21, 1
      %p95 = por %p93, %p94
      %p96 = scmp.ne.s32.totalorder %s87, %s88
      %p97 = scmp.eq.s32.totalorder %s21, 0
      %p98 = por %p96, %p97
      %p99 = scmp.ne.s32.totalorder %s87, %s88
      %p100 = scmp.eq.s32.totalorder %s22, 1
      %p101 = por %p99, %p100
      %p103 = scmp.ne.s32.totalorder %s88, %s102
      %p104 = scmp.eq.s32.totalorder %s22, 0
      %p105 = por %p103, %p104
      %s106 = ssub.s32 %s23, %s35
      %s107 = ssub.s32 %s24, %s31
      %s108 = sor.u32 %s106, %s107
      %p109 = scmp.eq.s32.totalorder %s108, 0
      %s111 = sadd.s32 %s110, 1
      %s112 = scalar_select %p109, %s110, %s111
      %p115 = pneg %p109
      %p116 = scmp.eq.s32.totalorder %s16, 1
      %p117 = por %p115, %p116
      %p118 = scmp.ne.s32.totalorder %s110, %s113
      %p119 = scmp.eq.s32.totalorder %s16, 0
      %p120 = por %p118, %p119
      %p121 = scmp.ne.s32.totalorder %s110, %s113
      %p122 = scmp.eq.s32.totalorder %s21, 1
      %p123 = por %p121, %p122
      %p124 = scmp.ne.s32.totalorder %s113, %s114
      %p125 = scmp.eq.s32.totalorder %s21, 0
      %p126 = por %p124, %p125
      %p127 = scmp.ne.s32.totalorder %s113, %s114
      %p128 = scmp.eq.s32.totalorder %s22, 1
      %p129 = por %p127, %p128
      %p131 = scmp.ne.s32.totalorder %s114, %s130
      %p132 = scmp.eq.s32.totalorder %s22, 0
      %p133 = por %p131, %p132
      %p134 = scmp.le.s32.totalorder 1, %s16
      %p135 = scmp.lt.s32.totalorder %s16, 3
      %p136 = pnand %p134, %p135
      %p137 = pneg %p136
      // Predicated region
      $region9: #{tpu_custom_call.1} parent=5 // pred_check
        _
      $region10: #{tpu_custom_call.1} parent=5 // pred_check_branch
        %139 = sbr.rel (%p136) target = $region12
      $region11: #{tpu_custom_call.1} parent=5 // pred_region
        %s140 = ssub.s32 %s16, 1
        // Predicated region
        $region13: #{tpu_custom_call.1} parent=11 // pred_check
          %p141 = pneg %p77
        $region14: #{tpu_custom_call.1} parent=11 // pred_check_branch
          %143 = sbr.rel (%p141) target = $region16
        $region15: #{tpu_custom_call.1} parent=11 // pred_region
          %s145 = ssub.s32 512, 512
          %146 = vsyncadd [#allocation6], %s145
          %s147 = sshll.u32 [#allocation5], 4
          %s148 = int_to_ptr.vmem [resolvable:$true] %s147
          %153 = dma.hbm_to_vmem [thread:$0]  %s1, 512, %s148, [#allocation6], 128, 128, 8
        $region16: #{tpu_custom_call.1} parent=11 // pred_fallthru
          _
        // Predicated region
        $region17: #{tpu_custom_call.1} parent=11 // pred_check
          %p154 = pneg %p98
        $region18: #{tpu_custom_call.1} parent=11 // pred_check_branch
          %156 = sbr.rel (%p154) target = $region20
        $region19: #{tpu_custom_call.1} parent=11 // pred_region
          _
        $region20: #{tpu_custom_call.1} parent=11 // pred_fallthru
          _
      $region12: #{tpu_custom_call.1} parent=5 // pred_fallthru
        _
      %p157 = scmp.lt.s32.totalorder %s16, 2
      // Predicated region
      $region21: #{tpu_custom_call.1} parent=5 // pred_check
        %p158 = pneg %p157
      $region22: #{tpu_custom_call.1} parent=5 // pred_check_branch
        %160 = sbr.rel (%p158) target = $region24
      $region23: #{tpu_custom_call.1} parent=5 // pred_region
        // Predicated region
        $region25: #{tpu_custom_call.1} parent=23 // pred_check
          %p161 = pneg %p50
        $region26: #{tpu_custom_call.1} parent=23 // pred_check_branch
          %163 = sbr.rel (%p161) target = $region28
        $region27: #{tpu_custom_call.1} parent=23 // pred_region
          %s164 = sand.u32 %s40, 1
          %s165 = scalar_lea.sflag [#allocation3], %s164
          %s166 = sand.u32 %s40, 1
          %s167 = smul.addr %s166, 64
          %s168 = scalar_lea.vmem [#allocation2], %s167
          %s169 = smul.u32 2, %s24
          %s171 = ssub.s32 1024, 1024
          %172 = vsyncadd %s165, %s171
          %s173 = smul.addr %s23, 8
          %s174 = sadd.s32 %s169, %s173
          %s175 = smul.addr %s174, 128
          %s176 = scalar_lea.hbm %s0, %s175
          %s177 = sshll.u32 %s168, 4
          %s178 = int_to_ptr.vmem [resolvable:$true] %s177
          %183 = dma.hbm_to_vmem [thread:$0]  %s176, 1024, %s178, %s165, 256, 256, 16
        $region28: #{tpu_custom_call.1} parent=23 // pred_fallthru
          _
      $region24: #{tpu_custom_call.1} parent=5 // pred_fallthru
        _
      %p184 = scmp.le.s32.totalorder 1, %s16
      %p185 = scmp.lt.s32.totalorder %s16, 3
      %p186 = pnand %p184, %p185
      %p187 = pneg %p186
      // Predicated region
      $region29: #{tpu_custom_call.1} parent=5 // pred_check
        _
      $region30: #{tpu_custom_call.1} parent=5 // pred_check_branch
        %189 = sbr.rel (%p186) target = $region32
      $region31: #{tpu_custom_call.1} parent=5 // pred_region
        %s190 = ssub.s32 %s16, 1
        %s191 = sand.u32 %s43, 1
        %s192 = scalar_lea.sflag [#allocation3], %s191
        %s193 = sand.u32 %s43, 1
        %s194 = smul.addr %s193, 64
        %s195 = scalar_lea.vmem [#allocation2], %s194
        // Predicated region
        $region33: #{tpu_custom_call.1} parent=31 // pred_check
          %p196 = pneg %p56
        $region34: #{tpu_custom_call.1} parent=31 // pred_check_branch
          %198 = sbr.rel (%p196) target = $region36
        $region35: #{tpu_custom_call.1} parent=31 // pred_region
          %199 = dma.done %s192, 1024
        $region36: #{tpu_custom_call.1} parent=31 // pred_fallthru
          _
        // Predicated region
        $region37: #{tpu_custom_call.1} parent=31 // pred_check
          %p200 = pneg %p77
        $region38: #{tpu_custom_call.1} parent=31 // pred_check_branch
          %202 = sbr.rel (%p200) target = $region40
        $region39: #{tpu_custom_call.1} parent=31 // pred_region
          %203 = dma.done [#allocation6], 512
        $region40: #{tpu_custom_call.1} parent=31 // pred_fallthru
          _
        %s204 = sand.u32 %s43, 1
        %s205 = scalar_lea.sflag [#allocation3], %s204
        %s206 = sand.u32 %s43, 1
        %s207 = smul.addr %s206, 64
        %s208 = scalar_lea.vmem [#allocation2], %s207
        %p209 = pneg %p56
        %p210 = pneg %p53
        %p211 = pneg %p77
        %p212 = pneg %p74
        %p213 = pneg %p98
        %p214 = pneg %p95
        %p215 = pneg %p126
        %p216 = pneg %p123
        %s217 = sand.u32 %s113, 1
        %s218 = scalar_lea.sflag [#allocation4], %s217
        %s219 = sand.u32 %s113, 1
        %s220 = smul.addr %s219, 256
        %s221 = scalar_lea.vmem [#allocation7], %s220
        %s222 = smul.u32 2, %s26
        %s223 = smul.u32 32, %s26
        %v224 = vld [vmem:[%s195] sm:$0xff]
        %v225 = vld [vmem:[%s195 + $0x8] sm:$0xff]
        %v226 = vld [vmem:[%s195 + $0x10] sm:$0xff]
        %v227 = vld [vmem:[%s195 + $0x18] sm:$0xff]
        %v228 = vld [vmem:[%s195 + $0x20] sm:$0xff]
        %v229 = vld [vmem:[%s195 + $0x28] sm:$0xff]
        %v230 = vld [vmem:[%s195 + $0x30] sm:$0xff]
        %v231 = vld [vmem:[%s195 + $0x38] sm:$0xff]
        %v232 = vld [vmem:[#allocation5] sm:$0xff]
        %v233 = vld [vmem:[#allocation5 + $0x8] sm:$0xff]
        %v234 = vld [vmem:[#allocation5 + $0x10] sm:$0xff]
        %v235 = vld [vmem:[#allocation5 + $0x18] sm:$0xff]
        %v236 = vld [vmem:[%s2] sm:$0x1]
        %v238 = vlaneseq
        %v239 = vshrl.u32 %v238, 7
        %v240 = vsub.s32 0, %v239
        %v241 = vrot.slane %v236, %v240
        %243 = vxpose.xlu0.b32.start [1/16] %v224, 128
        %244 = vxpose.xlu0.b32.cont [2/16] %v226, 128
        %245 = vxpose.xlu0.b32.cont [3/16] %v228, 128
        %246 = vxpose.xlu0.b32.cont [4/16] %v230, 128
        %247 = vxpose.xlu0.b32.cont [5/16] 0.0, 128
        %248 = vxpose.xlu0.b32.cont [6/16] 0.0, 128
        %249 = vxpose.xlu0.b32.cont [7/16] 0.0, 128
        %250 = vxpose.xlu0.b32.cont [8/16] 0.0, 128
        %251 = vxpose.xlu0.b32.cont [9/16] 0.0, 128
        %252 = vxpose.xlu0.b32.cont [10/16] 0.0, 128
        %253 = vxpose.xlu0.b32.cont [11/16] 0.0, 128
        %254 = vxpose.xlu0.b32.cont [12/16] 0.0, 128
        %255 = vxpose.xlu0.b32.cont [13/16] 0.0, 128
        %256 = vxpose.xlu0.b32.cont [14/16] 0.0, 128
        %257 = vxpose.xlu0.b32.cont [15/16] 0.0, 128
        %258 = vxpose.xlu0.b32.end [16/16] 0.0, 128
        %v259 = vpop.trf.xlu0
        %v260 = vpop.trf.xlu0
        %v261 = vpop.trf.xlu0
        %v262 = vpop.trf.xlu0
        %v263 = vpop.trf.xlu0
        %v264 = vpop.trf.xlu0
        %v265 = vpop.trf.xlu0
        %v266 = vpop.trf.xlu0
        %v267 = vpop.trf.xlu0
        %v268 = vpop.trf.xlu0
        %v269 = vpop.trf.xlu0
        %v270 = vpop.trf.xlu0
        %v271 = vpop.trf.xlu0
        %v272 = vpop.trf.xlu0
        %v273 = vpop.trf.xlu0
        %v274 = vpop.trf.xlu0
        %275 = vxpose.xlu0.b32.start [1/16] %v225, 128
        %276 = vxpose.xlu0.b32.cont [2/16] %v227, 128
        %277 = vxpose.xlu0.b32.cont [3/16] %v229, 128
        %278 = vxpose.xlu0.b32.cont [4/16] %v231, 128
        %279 = vxpose.xlu0.b32.cont [5/16] 0.0, 128
        %280 = vxpose.xlu0.b32.cont [6/16] 0.0, 128
        %281 = vxpose.xlu0.b32.cont [7/16] 0.0, 128
        %282 = vxpose.xlu0.b32.cont [8/16] 0.0, 128
        %283 = vxpose.xlu0.b32.cont [9/16] 0.0, 128
        %284 = vxpose.xlu0.b32.cont [10/16] 0.0, 128
        %285 = vxpose.xlu0.b32.cont [11/16] 0.0, 128
        %286 = vxpose.xlu0.b32.cont [12/16] 0.0, 128
        %287 = vxpose.xlu0.b32.cont [13/16] 0.0, 128
        %288 = vxpose.xlu0.b32.cont [14/16] 0.0, 128
        %289 = vxpose.xlu0.b32.cont [15/16] 0.0, 128
        %290 = vxpose.xlu0.b32.end [16/16] 0.0, 128
        %v291 = vpop.trf.xlu0
        %v292 = vpop.trf.xlu0
        %v293 = vpop.trf.xlu0
        %v294 = vpop.trf.xlu0
        %v295 = vpop.trf.xlu0
        %v296 = vpop.trf.xlu0
        %v297 = vpop.trf.xlu0
        %v298 = vpop.trf.xlu0
        %v299 = vpop.trf.xlu0
        %v300 = vpop.trf.xlu0
        %v301 = vpop.trf.xlu0
        %v302 = vpop.trf.xlu0
        %v303 = vpop.trf.xlu0
        %v304 = vpop.trf.xlu0
        %v305 = vpop.trf.xlu0
        %v306 = vpop.trf.xlu0
        %vm307 = vcmask 261120
        %v309 = vsel %vm307, %v259, 0
        %v312 = vsel %vm307, %v260, 0
        %v315 = vsel %vm307, %v261, 0
        %v318 = vsel %vm307, %v262, 0
        %v321 = vsel %vm307, %v263, 0
        %v324 = vsel %vm307, %v264, 0
        %v327 = vsel %vm307, %v265, 0
        %v330 = vsel %vm307, %v266, 0
        %v333 = vsel %vm307, %v267, 0
        %v336 = vsel %vm307, %v268, 0
        %v339 = vsel %vm307, %v269, 0
        %v342 = vsel %vm307, %v270, 0
        %v345 = vsel %vm307, %v271, 0
        %v348 = vsel %vm307, %v272, 0
        %v351 = vsel %vm307, %v273, 0
        %v354 = vsel %vm307, %v274, 0
        %v357 = vsel %vm307, %v291, 0
        %v360 = vsel %vm307, %v292, 0
        %v363 = vsel %vm307, %v293, 0
        %v366 = vsel %vm307, %v294, 0
        %v369 = vsel %vm307, %v295, 0
        %v372 = vsel %vm307, %v296, 0
        %v375 = vsel %vm307, %v297, 0
        %v378 = vsel %vm307, %v298, 0
        %v381 = vsel %vm307, %v299, 0
        %v384 = vsel %vm307, %v300, 0
        %v387 = vsel %vm307, %v301, 0
        %v390 = vsel %vm307, %v302, 0
        %v393 = vsel %vm307, %v303, 0
        %v396 = vsel %vm307, %v304, 0
        %v399 = vsel %vm307, %v305, 0
        %v402 = vsel %vm307, %v306, 0
        %404 = vmatprep.subr.mxu0 0.0
        %405 = vmatpush1.msra.mxu0 %v232
        %406 = vmatprep.subr.mxu0 0.0
        %407 = vmatpush1.msra.mxu0 %v233
        %408 = vmatprep.subr.mxu0 0.0
        %409 = vmatpush1.msra.mxu0 %v234
        %410 = vmatprep.subr.mxu0 0.0
        %411 = vmatpush1.msra.mxu0 %v235
        %412 = vmatprep.subr.mxu0 0.0
        %413 = vmatpush1.msra.mxu0 0.0
        %414 = vmatprep.subr.mxu0 0.0
        %415 = vmatpush1.msra.mxu0 0.0
        %416 = vmatprep.subr.mxu0 0.0
        %417 = vmatpush1.msra.mxu0 0.0
        %418 = vmatprep.subr.mxu0 0.0
        %419 = vmatpush1.msra.mxu0 0.0
        %420 = vmatprep.subr.mxu0 0.0
        %421 = vmatpush1.msra.mxu0 0.0
        %422 = vmatprep.subr.mxu0 0.0
        %423 = vmatpush1.msra.mxu0 0.0
        %424 = vmatprep.subr.mxu0 0.0
        %425 = vmatpush1.msra.mxu0 0.0
        %426 = vmatprep.subr.mxu0 0.0
        %427 = vmatpush1.msra.mxu0 0.0
        %428 = vmatprep.subr.mxu0 0.0
        %429 = vmatpush1.msra.mxu0 0.0
        %430 = vmatprep.subr.mxu0 0.0
        %431 = vmatpush1.msra.mxu0 0.0
        %432 = vmatprep.subr.mxu0 0.0
        %433 = vmatpush1.msra.mxu0 0.0
        %434 = vmatprep.subr.mxu0 0.0
        %435 = vmatpush1.msra.mxu0 0.0
        %436 = vmatprep.subr.mxu0 0.0
        %437 = vmatpush1.msra.mxu0 0.0
        %438 = vmatprep.subr.mxu0 0.0
        %439 = vmatpush1.msra.mxu0 0.0
        %440 = vmatprep.subr.mxu0 0.0
        %441 = vmatpush1.msra.mxu0 0.0
        %442 = vmatprep.subr.mxu0 0.0
        %443 = vmatpush1.msra.mxu0 0.0
        %444 = vmatprep.subr.mxu0 0.0
        %445 = vmatpush1.msra.mxu0 0.0
        %446 = vmatprep.subr.mxu0 0.0
        %447 = vmatpush1.msra.mxu0 0.0
        %448 = vmatprep.subr.mxu0 0.0
        %449 = vmatpush1.msra.mxu0 0.0
        %450 = vmatprep.subr.mxu0 0.0
        %451 = vmatpush1.msra.mxu0 0.0
        %452 = vmatprep.subr.mxu0 0.0
        %453 = vmatpush1.msra.mxu0 0.0
        %454 = vmatprep.subr.mxu0 0.0
        %455 = vmatpush1.msra.mxu0 0.0
        %456 = vmatprep.subr.mxu0 0.0
        %457 = vmatpush1.msra.mxu0 0.0
        %458 = vmatprep.subr.mxu0 0.0
        %459 = vmatpush1.msra.mxu0 0.0
        %460 = vmatprep.subr.mxu0 0.0
        %461 = vmatpush1.msra.mxu0 0.0
        %462 = vmatprep.subr.mxu0 0.0
        %463 = vmatpush1.msra.mxu0 0.0
        %464 = vmatprep.subr.mxu0 0.0
        %465 = vmatpush1.msra.mxu0 0.0
        %466 = vmatprep.subr.mxu0 0.0
        %467 = vmatpush1.msra.mxu0 0.0
        %468 = vmatprep.mubr.f32.mxu0 0.0
        %469 = vmatmul.mubr.f32.gmra.mrb[0].mxu0 %v309
        %v470 = vpop.f32.mrb[0].mxu0
        %v471 = vadd.f32 %v241, %v470
        %v472 = vpop.f32.mrb[0].mxu0
        %473 = vmatprep.mubr.f32.mxu0 0.0
        %474 = vmatmul.mubr.f32.gmra.mrb[0].mxu0 %v312
        %v475 = vpop.f32.mrb[0].mxu0
        %v476 = vadd.f32 %v241, %v475
        %v477 = vpop.f32.mrb[0].mxu0
        %478 = vmatprep.mubr.f32.mxu0 0.0
        %479 = vmatmul.mubr.f32.gmra.mrb[0].mxu0 %v315
        %v480 = vpop.f32.mrb[0].mxu0
        %v481 = vadd.f32 %v241, %v480
        %v482 = vpop.f32.mrb[0].mxu0
        %483 = vmatprep.mubr.f32.mxu0 0.0
        %484 = vmatmul.mubr.f32.gmra.mrb[0].mxu0 %v318
        %v485 = vpop.f32.mrb[0].mxu0
        %v486 = vadd.f32 %v241, %v485
        %v487 = vpop.f32.mrb[0].mxu0
        %488 = vmatprep.mubr.f32.mxu0 0.0
        %489 = vmatmul.mubr.f32.gmra.mrb[0].mxu0 %v321
        %v490 = vpop.f32.mrb[0].mxu0
        %v491 = vadd.f32 %v241, %v490
        %v492 = vpop.f32.mrb[0].mxu0
        %493 = vmatprep.mubr.f32.mxu0 0.0
        %494 = vmatmul.mubr.f32.gmra.mrb[0].mxu0 %v324
        %v495 = vpop.f32.mrb[0].mxu0
        %v496 = vadd.f32 %v241, %v495
        %v497 = vpop.f32.mrb[0].mxu0
        %498 = vmatprep.mubr.f32.mxu0 0.0
        %499 = vmatmul.mubr.f32.gmra.mrb[0].mxu0 %v327
        %v500 = vpop.f32.mrb[0].mxu0
        %v501 = vadd.f32 %v241, %v500
        %v502 = vpop.f32.mrb[0].mxu0
        %503 = vmatprep.mubr.f32.mxu0 0.0
        %504 = vmatmul.mubr.f32.gmra.mrb[0].mxu0 %v330
        %v505 = vpop.f32.mrb[0].mxu0
        %v506 = vadd.f32 %v241, %v505
        %v507 = vpop.f32.mrb[0].mxu0
        %508 = vmatprep.mubr.f32.mxu0 0.0
        %509 = vmatmul.mubr.f32.gmra.mrb[0].mxu0 %v333
        %v510 = vpop.f32.mrb[0].mxu0
        %v511 = vadd.f32 %v241, %v510
        %v512 = vpop.f32.mrb[0].mxu0
        %513 = vmatprep.mubr.f32.mxu0 0.0
        %514 = vmatmul.mubr.f32.gmra.mrb[0].mxu0 %v336
        %v515 = vpop.f32.mrb[0].mxu0
        %v516 = vadd.f32 %v241, %v515
        %v517 = vpop.f32.mrb[0].mxu0
        %518 = vmatprep.mubr.f32.mxu0 0.0
        %519 = vmatmul.mubr.f32.gmra.mrb[0].mxu0 %v339
        %v520 = vpop.f32.mrb[0].mxu0
        %v521 = vadd.f32 %v241, %v520
        %v522 = vpop.f32.mrb[0].mxu0
        %523 = vmatprep.mubr.f32.mxu0 0.0
        %524 = vmatmul.mubr.f32.gmra.mrb[0].mxu0 %v342
        %v525 = vpop.f32.mrb[0].mxu0
        %v526 = vadd.f32 %v241, %v525
        %v527 = vpop.f32.mrb[0].mxu0
        %528 = vmatprep.mubr.f32.mxu0 0.0
        %529 = vmatmul.mubr.f32.gmra.mrb[0].mxu0 %v345
        %v530 = vpop.f32.mrb[0].mxu0
        %v531 = vadd.f32 %v241, %v530
        %v532 = vpop.f32.mrb[0].mxu0
        %533 = vmatprep.mubr.f32.mxu0 0.0
        %534 = vmatmul.mubr.f32.gmra.mrb[0].mxu0 %v348
        %v535 = vpop.f32.mrb[0].mxu0
        %v536 = vadd.f32 %v241, %v535
        %v537 = vpop.f32.mrb[0].mxu0
        %538 = vmatprep.mubr.f32.mxu0 0.0
        %539 = vmatmul.mubr.f32.gmra.mrb[0].mxu0 %v351
        %v540 = vpop.f32.mrb[0].mxu0
        %v541 = vadd.f32 %v241, %v540
        %v542 = vpop.f32.mrb[0].mxu0
        %543 = vmatprep.mubr.f32.mxu0 0.0
        %544 = vmatmul.mubr.f32.gmra.mrb[0].mxu0 %v354
        %v545 = vpop.f32.mrb[0].mxu0
        %v546 = vadd.f32 %v241, %v545
        %v547 = vpop.f32.mrb[0].mxu0
        %548 = vmatprep.mubr.f32.mxu0 0.0
        %549 = vmatmul.mubr.f32.gmra.mrb[0].mxu0 %v357
        %v550 = vpop.f32.mrb[0].mxu0
        %v551 = vadd.f32 %v241, %v550
        %v552 = vpop.f32.mrb[0].mxu0
        %553 = vmatprep.mubr.f32.mxu0 0.0
        %554 = vmatmul.mubr.f32.gmra.mrb[0].mxu0 %v360
        %v555 = vpop.f32.mrb[0].mxu0
        %v556 = vadd.f32 %v241, %v555
        %v557 = vpop.f32.mrb[0].mxu0
        %558 = vmatprep.mubr.f32.mxu0 0.0
        %559 = vmatmul.mubr.f32.gmra.mrb[0].mxu0 %v363
        %v560 = vpop.f32.mrb[0].mxu0
        %v561 = vadd.f32 %v241, %v560
        %v562 = vpop.f32.mrb[0].mxu0
        %563 = vmatprep.mubr.f32.mxu0 0.0
        %564 = vmatmul.mubr.f32.gmra.mrb[0].mxu0 %v366
        %v565 = vpop.f32.mrb[0].mxu0
        %v566 = vadd.f32 %v241, %v565
        %v567 = vpop.f32.mrb[0].mxu0
        %568 = vmatprep.mubr.f32.mxu0 0.0
        %569 = vmatmul.mubr.f32.gmra.mrb[0].mxu0 %v369
        %v570 = vpop.f32.mrb[0].mxu0
        %v571 = vadd.f32 %v241, %v570
        %v572 = vpop.f32.mrb[0].mxu0
        %573 = vmatprep.mubr.f32.mxu0 0.0
        %574 = vmatmul.mubr.f32.gmra.mrb[0].mxu0 %v372
        %v575 = vpop.f32.mrb[0].mxu0
        %v576 = vadd.f32 %v241, %v575
        %v577 = vpop.f32.mrb[0].mxu0
        %578 = vmatprep.mubr.f32.mxu0 0.0
        %579 = vmatmul.mubr.f32.gmra.mrb[0].mxu0 %v375
        %v580 = vpop.f32.mrb[0].mxu0
        %v581 = vadd.f32 %v241, %v580
        %v582 = vpop.f32.mrb[0].mxu0
        %583 = vmatprep.mubr.f32.mxu0 0.0
        %584 = vmatmul.mubr.f32.gmra.mrb[0].mxu0 %v378
        %v585 = vpop.f32.mrb[0].mxu0
        %v586 = vadd.f32 %v241, %v585
        %v587 = vpop.f32.mrb[0].mxu0
        %588 = vmatprep.mubr.f32.mxu0 0.0
        %589 = vmatmul.mubr.f32.gmra.mrb[0].mxu0 %v381
        %v590 = vpop.f32.mrb[0].mxu0
        %v591 = vadd.f32 %v241, %v590
        %v592 = vpop.f32.mrb[0].mxu0
        %593 = vmatprep.mubr.f32.mxu0 0.0
        %594 = vmatmul.mubr.f32.gmra.mrb[0].mxu0 %v384
        %v595 = vpop.f32.mrb[0].mxu0
        %v596 = vadd.f32 %v241, %v595
        %v597 = vpop.f32.mrb[0].mxu0
        %598 = vmatprep.mubr.f32.mxu0 0.0
        %599 = vmatmul.mubr.f32.gmra.mrb[0].mxu0 %v387
        %v600 = vpop.f32.mrb[0].mxu0
        %v601 = vadd.f32 %v241, %v600
        %v602 = vpop.f32.mrb[0].mxu0
        %603 = vmatprep.mubr.f32.mxu0 0.0
        %604 = vmatmul.mubr.f32.gmra.mrb[0].mxu0 %v390
        %v605 = vpop.f32.mrb[0].mxu0
        %v606 = vadd.f32 %v241, %v605
        %v607 = vpop.f32.mrb[0].mxu0
        %608 = vmatprep.mubr.f32.mxu0 0.0
        %609 = vmatmul.mubr.f32.gmra.mrb[0].mxu0 %v393
        %v610 = vpop.f32.mrb[0].mxu0
        %v611 = vadd.f32 %v241, %v610
        %v612 = vpop.f32.mrb[0].mxu0
        %613 = vmatprep.mubr.f32.mxu0 0.0
        %614 = vmatmul.mubr.f32.gmra.mrb[0].mxu0 %v396
        %v615 = vpop.f32.mrb[0].mxu0
        %v616 = vadd.f32 %v241, %v615
        %v617 = vpop.f32.mrb[0].mxu0
        %618 = vmatprep.mubr.f32.mxu0 0.0
        %619 = vmatmul.mubr.f32.gmra.mrb[0].mxu0 %v399
        %v620 = vpop.f32.mrb[0].mxu0
        %v621 = vadd.f32 %v241, %v620
        %v622 = vpop.f32.mrb[0].mxu0
        %623 = vmatprep.mubr.f32.mxu0 0.0
        %624 = vmatmul.mubr.f32.gmra.mrb[0].mxu0 %v402
        %v625 = vpop.f32.mrb[0].mxu0
        %v626 = vadd.f32 %v241, %v625
        %v627 = vpop.f32.mrb[0].mxu0
        %628 = vdwg.mxu0
        %629 = vst [vmem:[%s221] sm:$0xff] %v471
        %630 = vst [vmem:[%s221 + $0x8] sm:$0xff] %v476
        %631 = vst [vmem:[%s221 + $0x10] sm:$0xff] %v481
        %632 = vst [vmem:[%s221 + $0x18] sm:$0xff] %v486
        %633 = vst [vmem:[%s221 + $0x20] sm:$0xff] %v491
        %634 = vst [vmem:[%s221 + $0x28] sm:$0xff] %v496
        %635 = vst [vmem:[%s221 + $0x30] sm:$0xff] %v501
        %636 = vst [vmem:[%s221 + $0x38] sm:$0xff] %v506
        %637 = vst [vmem:[%s221 + $0x40] sm:$0xff] %v511
        %638 = vst [vmem:[%s221 + $0x48] sm:$0xff] %v516
        %639 = vst [vmem:[%s221 + $0x50] sm:$0xff] %v521
        %640 = vst [vmem:[%s221 + $0x58] sm:$0xff] %v526
        %641 = vst [vmem:[%s221 + $0x60] sm:$0xff] %v531
        %642 = vst [vmem:[%s221 + $0x68] sm:$0xff] %v536
        %643 = vst [vmem:[%s221 + $0x70] sm:$0xff] %v541
        %644 = vst [vmem:[%s221 + $0x78] sm:$0xff] %v546
        %645 = vst [vmem:[%s221 + $0x80] sm:$0xff] %v551
        %646 = vst [vmem:[%s221 + $0x88] sm:$0xff] %v556
        %647 = vst [vmem:[%s221 + $0x90] sm:$0xff] %v561
        %648 = vst [vmem:[%s221 + $0x98] sm:$0xff] %v566
        %649 = vst [vmem:[%s221 + $0xa0] sm:$0xff] %v571
        %650 = vst [vmem:[%s221 + $0xa8] sm:$0xff] %v576
        %651 = vst [vmem:[%s221 + $0xb0] sm:$0xff] %v581
        %652 = vst [vmem:[%s221 + $0xb8] sm:$0xff] %v586
        %653 = vst [vmem:[%s221 + $0xc0] sm:$0xff] %v591
        %654 = vst [vmem:[%s221 + $0xc8] sm:$0xff] %v596
        %655 = vst [vmem:[%s221 + $0xd0] sm:$0xff] %v601
        %656 = vst [vmem:[%s221 + $0xd8] sm:$0xff] %v606
        %657 = vst [vmem:[%s221 + $0xe0] sm:$0xff] %v611
        %658 = vst [vmem:[%s221 + $0xe8] sm:$0xff] %v616
        %659 = vst [vmem:[%s221 + $0xf0] sm:$0xff] %v621
        %660 = vst [vmem:[%s221 + $0xf8] sm:$0xff] %v626
        %s661 = sand.u32 %s113, 1
        %s662 = scalar_lea.sflag [#allocation4], %s661
        %s663 = sand.u32 %s113, 1
        %s664 = smul.addr %s663, 256
        %s665 = scalar_lea.vmem [#allocation7], %s664
        // Predicated region
        $region41: #{tpu_custom_call.1} parent=31 // pred_check
          %p666 = pneg %p123
        $region42: #{tpu_custom_call.1} parent=31 // pred_check_branch
          %668 = sbr.rel (%p666) target = $region44
        $region43: #{tpu_custom_call.1} parent=31 // pred_region
          %s669 = smul.u32 32, %s26
          %s671 = ssub.s32 4096, 4096
          %672 = vsyncadd %s662, %s671
          %s673 = smul.addr %s25, 32
          %s674 = sadd.s32 %s669, %s673
          %s675 = smul.addr %s674, 128
          %s676 = scalar_lea.hbm %s3, %s675
          %s677 = sshll.u32 %s665, 4
          %s678 = int_to_ptr.vmem [resolvable:$true] %s677
          %683 = dma.vmem_to_hbm [thread:$0]  %s678, 4096, %s676, %s662, 128, 128, 8
        $region44: #{tpu_custom_call.1} parent=31 // pred_fallthru
          _
      $region32: #{tpu_custom_call.1} parent=5 // pred_fallthru
        _
      %p684 = scmp.le.s32.totalorder 2, %s16
      // Predicated region
      $region45: #{tpu_custom_call.1} parent=5 // pred_check
        %p685 = pneg %p684
      $region46: #{tpu_custom_call.1} parent=5 // pred_check_branch
        %687 = sbr.rel (%p685) target = $region48
      $region47: #{tpu_custom_call.1} parent=5 // pred_region
        %s688 = ssub.s32 %s16, 2
        // Predicated region
        $region49: #{tpu_custom_call.1} parent=47 // pred_check
          %p689 = pneg %p129
        $region50: #{tpu_custom_call.1} parent=47 // pred_check_branch
          %691 = sbr.rel (%p689) target = $region52
        $region51: #{tpu_custom_call.1} parent=47 // pred_region
          %s692 = sand.u32 %s114, 1
          %s693 = scalar_lea.sflag [#allocation4], %s692
          %s694 = sand.u32 %s114, 1
          %s695 = smul.addr %s694, 256
          %s696 = scalar_lea.vmem [#allocation7], %s695
          %697 = dma.done %s693, 4096
        $region52: #{tpu_custom_call.1} parent=47 // pred_fallthru
          _
      $region48: #{tpu_custom_call.1} parent=5 // pred_fallthru
        _
    $region6: #{tpu_custom_call.1} parent=1 // loop_footer
      %s20 = sadd.s32 1, %s16
    $region7: #{tpu_custom_call.1} parent=1 // loop_footer_branch
      %15 = sbr.rel target = $region3
    $region8: #{tpu_custom_call.1} parent=1 // loop_exit
      _
    %698 = vsyncpa [#allocation3], 1
    %s699 = scalar_lea.sflag [#allocation3], 1
    %700 = vsyncpa %s699, 1
    %701 = vsyncpa [#allocation6], 1
    %702 = vsyncpa [#allocation4], 1
    %s703 = scalar_lea.sflag [#allocation4], 1
    %704 = vsyncpa %s703, 1

</llo_original>
